<compile_context>
chip_gen: v6e
topology: v6e:2x2x1
jax: 0.10.0
libtpu: 0.0.40
codegen_flags: <defaults>
</compile_context>

<pallas_src>
import numpy as np
import jax
import jax.numpy as jnp
from jax import lax
from jax.experimental import pallas as pl
from jax.experimental.pallas import tpu as pltpu


def create_kernel_1d(width, odd=True, ratio=2):
    # TODO(synk): `create_kernel` is not defined in the provided source; we use a
    # deterministic Hann-windowed separable sinc low-pass (cutoff = 1/(2*ratio)),
    # odd size ~ width/2, normalized to unit DC gain.  The module's 2-D filter is
    # outer(h, h) of these taps.  Both the Pallas kernel and the reference use it.
    half = max(width // 4, 1)
    K = 2 * half + 1
    n = np.arange(K, dtype=np.float64) - half
    fc = 1.0 / (2.0 * ratio)
    h = 2.0 * fc * np.sinc(2.0 * fc * n)
    w = 0.5 - 0.5 * np.cos(2.0 * np.pi * np.arange(K) / (K - 1))
    h = h * w
    h = h / h.sum()
    return h  # numpy float64, odd length K


def _polyphase_matrix(h, N, ratio):
    """Dense (N x ratio*N) matrix M s.t. for a length-N signal x (as a row),
    (x @ M)[o] = sum_b h[b] * xz[o + b - half], where xz is the zero-stuffed,
    ratio-scaled, zero-padded signal (per separable axis).  Out-of-range taps are
    simply absent, which folds the constant zero padding into the matrix."""
    h = np.asarray(h, np.float64)
    K = len(h)
    half = K // 2
    t = np.arange(N)[:, None]              # input index
    o = np.arange(ratio * N)[None, :]      # output (upsampled) index
    b = half + ratio * t - o               # which tap connects x[t] -> y[o]
    valid = (b >= 0) & (b < K)
    m = np.zeros((N, ratio * N), np.float64)
    m[valid] = ratio * h[b[valid]]         # fold `ratio` gain per separable axis
    return m


def _make_upsample_kernel(Bt):
    """Kernel body: per image, two MXU matmuls  y = A_HT @ (x @ A_W)."""

    def kernel(x_ref, aw_ref, aht_ref, o_ref):
        # x_ref:   (Bt, H, W)            input images (original resolution)
        # aw_ref:  (W, ratio*W)  f32     column polyphase matrix
        # aht_ref: (ratio*H, H)  f32     row polyphase matrix (already transposed)
        # o_ref:   (Bt, ratio*H, ratio*W) upsampled output, final layout
        aw = aw_ref[...]
        aht = aht_ref[...]
        for i in range(Bt):  # statically unrolled; Bt is capped small
            xi = x_ref[i].astype(jnp.float32)                              # (H, W)
            t = jnp.dot(xi, aw, preferred_element_type=jnp.float32)        # (H, ratio*W)
            y = jnp.dot(aht, t, preferred_element_type=jnp.float32)        # (ratio*H, ratio*W)
            o_ref[i] = y.astype(o_ref.dtype)

    return kernel


def _pick_batch_tile(B, per_image_bytes, fixed_bytes, budget_bytes, bt_cap=8):
    """Largest divisor of B (<= bt_cap) whose block footprint fits the budget,
    preferring an even number (>=2) of grid steps so the 'parallel' axis splits
    across v7x's two TensorCores.  Returns None if even one image does not fit."""
    best = None
    for bt in range(1, min(B, bt_cap) + 1):
        if B % bt:
            continue
        if fixed_bytes + bt * per_image_bytes > budget_bytes:
            continue
        steps = B // bt
        key = (steps >= 2 and steps % 2 == 0, bt)
        if best is None or key > best[0]:
            best = (key, bt)
    return None if best is None else best[1]


def upsample2d(x, ratio=2):
    """Pallas version of UpSample2d.forward (separable polyphase upsampler on the MXU)."""
    shape = x.shape
    H, W = shape[-2], shape[-1]
    lead = shape[:-2]
    B = int(np.prod(lead)) if len(lead) > 0 else 1

    # The PyTorch module builds its low-pass from the *upsampled* width (last dim).
    h = create_kernel_1d(W * ratio, True, ratio)
    aw = jnp.asarray(_polyphase_matrix(h, W, ratio), jnp.float32)          # (W, ratio*W)
    aht = jnp.asarray(_polyphase_matrix(h, H, ratio).T, jnp.float32)       # (ratio*H, H)

    xb = x.reshape(B, H, W)
    H2, W2 = ratio * H, ratio * W

    # Per-block VMEM footprint estimate (double-buffered in+out blocks + matrices
    # + one image's f32 intermediates).
    item = jnp.dtype(x.dtype).itemsize
    per_image = 2 * (H * W + H2 * W2) * item
    fixed = 2 * (W * W2 + H2 * H) * 4 + 4 * (H * W2 + H2 * W2)
    budget = 12 << 20                      # fits v7x (64 MiB VMEM) with double buffering
    Bt = _pick_batch_tile(B, per_image, fixed, budget)
    if Bt is None:
        # TODO(synk): for very large frames, tile H into strips (slicing A_HT rows per
        # strip) and tile the contraction so blocks stay within v7x's 64 MiB VMEM.
        raise NotImplementedError("frame too large for a single VMEM block")

    kernel = _make_upsample_kernel(Bt)
    out = pl.pallas_call(
        kernel,
        out_shape=jax.ShapeDtypeStruct((B, H2, W2), x.dtype),
        grid=(B // Bt,),
        in_specs=[
            pl.BlockSpec((Bt, H, W), lambda b: (b, 0, 0)),
            pl.BlockSpec((W, W2), lambda b: (0, 0)),
            pl.BlockSpec((H2, H), lambda b: (0, 0)),
        ],
        out_specs=pl.BlockSpec((Bt, H2, W2), lambda b: (b, 0, 0)),
        compiler_params=pltpu.CompilerParams(
            dimension_semantics=("parallel",),
            vmem_limit_bytes=48 * 1024 * 1024,
        ),
    )(xb, aw, aht)

    return out.reshape(lead + (H2, W2))


def _reference(x, ratio=2):
    """Pure-JAX reference matching the PyTorch semantics (zero-stuff + dense 2-D conv)."""
    shape = x.shape
    H, W = shape[-2], shape[-1]
    H2, W2 = H * ratio, W * ratio
    xx = jnp.zeros(shape[:-2] + (H2, W2), x.dtype).at[..., ::ratio, ::ratio].set(x)
    xx = (ratio ** 2) * xx
    h = create_kernel_1d(W2, True, ratio)
    k2d = jnp.asarray(np.outer(h, h), jnp.float32)
    K = k2d.shape[-1]
    half = K // 2
    B = int(np.prod(shape[:-2])) if len(shape) > 2 else 1
    xb = xx.reshape(B, 1, H2, W2)
    xpad = jnp.pad(xb, ((0, 0), (0, 0), (half, half), (half, half)))
    out = lax.conv_general_dilated(
        xpad, k2d[None, None], window_strides=(1, 1), padding="VALID",
        dimension_numbers=("NCHW", "OIHW", "NCHW"),
        precision=lax.Precision.HIGHEST)
    out = out[:, :, :H2, :W2]
    return out.reshape(shape[:-2] + (H2, W2))


if __name__ == "__main__":
    key = jax.random.PRNGKey(0)
    x = jax.random.normal(key, (2, 4, 16, 16), dtype=jnp.float32)

    y = jax.block_until_ready(upsample2d(x, ratio=2))
    y_ref = jax.block_until_ready(_reference(x, ratio=2))

    assert y.shape == (2, 4, 32, 32), y.shape
    err = float(jnp.max(jnp.abs(y - y_ref)))
    assert jnp.allclose(y, y_ref, rtol=1e-4, atol=1e-4), err

    print("KERNEL_OK")
</pallas_src>

<mosaic_0001>
module attributes {stable_mosaic.version = 11 : i64} {
  func.func @kernel(%arg0: i32, %arg1: memref<4x16x16xf32, #tpu.memory_space<vmem>>, %arg2: memref<16x32xf32, #tpu.memory_space<vmem>>, %arg3: memref<32x16xf32, #tpu.memory_space<vmem>>, %arg4: memref<4x32x32xf32, #tpu.memory_space<vmem>>) attributes {dimension_semantics = [#tpu.dimension_semantics<parallel>], iteration_bounds = array<i64: 2>, scalar_prefetch = 0 : i64, scratch_operands = 0 : i64, tpu.core_type = #tpu.core_type<tc>, window_params = [{transform_indices = @transform_0, window_bounds = array<i64: 4, 16, 16>}, {pipeline_mode = #tpu.pipeline_mode<synchronous>, transform_indices = @transform_1, window_bounds = array<i64: 16, 32>}, {pipeline_mode = #tpu.pipeline_mode<synchronous>, transform_indices = @transform_2, window_bounds = array<i64: 32, 16>}, {transform_indices = @transform_3, window_bounds = array<i64: 4, 32, 32>}]} {
    %c0 = arith.constant 0 : index
    %c0_0 = arith.constant 0 : index
    %0 = vector.load %arg2[%c0, %c0_0] : memref<16x32xf32, #tpu.memory_space<vmem>>, vector<16x32xf32>
    %c0_1 = arith.constant 0 : index
    %c0_2 = arith.constant 0 : index
    %1 = vector.load %arg3[%c0_1, %c0_2] : memref<32x16xf32, #tpu.memory_space<vmem>>, vector<32x16xf32>
    %c0_3 = arith.constant 0 : index
    %c0_4 = arith.constant 0 : index
    %c0_5 = arith.constant 0 : index
    %2 = vector.load %arg1[%c0_3, %c0_4, %c0_5] : memref<4x16x16xf32, #tpu.memory_space<vmem>>, vector<1x16x16xf32>
    %3 = vector.shape_cast %2 : vector<1x16x16xf32> to vector<16x16xf32>
    %cst = arith.constant dense<0.000000e+00> : vector<16x32xf32>
    %4 = tpu.matmul %3, %0, %cst {dimension_numbers = #tpu.dot_dimension_numbers<[1], [0], [0], [1], [0, 0, 1, 1], [], []>} : vector<16x16xf32>, vector<16x32xf32>, vector<16x32xf32> -> vector<16x32xf32>
    %cst_6 = arith.constant dense<0.000000e+00> : vector<32x32xf32>
    %5 = tpu.matmul %1, %4, %cst_6 {dimension_numbers = #tpu.dot_dimension_numbers<[1], [0], [0], [1], [0, 0, 1, 1], [], []>} : vector<32x16xf32>, vector<16x32xf32>, vector<32x32xf32> -> vector<32x32xf32>
    %c0_7 = arith.constant 0 : index
    %c0_8 = arith.constant 0 : index
    %c0_9 = arith.constant 0 : index
    %6 = vector.load %arg4[%c0_7, %c0_8, %c0_9] : memref<4x32x32xf32, #tpu.memory_space<vmem>>, vector<1x32x32xf32>
    %7 = vector.shape_cast %6 : vector<1x32x32xf32> to vector<32x32xf32>
    %8 = vector.shape_cast %5 : vector<32x32xf32> to vector<1x32x32xf32>
    tpu.vector_store %arg4[%c0_7, %c0_8, %c0_9], %8 {strides = array<i32>} : memref<4x32x32xf32, #tpu.memory_space<vmem>>, vector<1x32x32xf32>,
    %c1 = arith.constant 1 : index
    %c0_10 = arith.constant 0 : index
    %c0_11 = arith.constant 0 : index
    %9 = vector.load %arg1[%c1, %c0_10, %c0_11] : memref<4x16x16xf32, #tpu.memory_space<vmem>>, vector<1x16x16xf32>
    %10 = vector.shape_cast %9 : vector<1x16x16xf32> to vector<16x16xf32>
    %cst_12 = arith.constant dense<0.000000e+00> : vector<16x32xf32>
    %11 = tpu.matmul %10, %0, %cst_12 {dimension_numbers = #tpu.dot_dimension_numbers<[1], [0], [0], [1], [0, 0, 1, 1], [], []>} : vector<16x16xf32>, vector<16x32xf32>, vector<16x32xf32> -> vector<16x32xf32>
    %cst_13 = arith.constant dense<0.000000e+00> : vector<32x32xf32>
    %12 = tpu.matmul %1, %11, %cst_13 {dimension_numbers = #tpu.dot_dimension_numbers<[1], [0], [0], [1], [0, 0, 1, 1], [], []>} : vector<32x16xf32>, vector<16x32xf32>, vector<32x32xf32> -> vector<32x32xf32>
    %c1_14 = arith.constant 1 : index
    %c0_15 = arith.constant 0 : index
    %c0_16 = arith.constant 0 : index
    %13 = vector.load %arg4[%c1_14, %c0_15, %c0_16] : memref<4x32x32xf32, #tpu.memory_space<vmem>>, vector<1x32x32xf32>
    %14 = vector.shape_cast %13 : vector<1x32x32xf32> to vector<32x32xf32>
    %15 = vector.shape_cast %12 : vector<32x32xf32> to vector<1x32x32xf32>
    tpu.vector_store %arg4[%c1_14, %c0_15, %c0_16], %15 {strides = array<i32>} : memref<4x32x32xf32, #tpu.memory_space<vmem>>, vector<1x32x32xf32>,
    %c2 = arith.constant 2 : index
    %c0_17 = arith.constant 0 : index
    %c0_18 = arith.constant 0 : index
    %16 = vector.load %arg1[%c2, %c0_17, %c0_18] : memref<4x16x16xf32, #tpu.memory_space<vmem>>, vector<1x16x16xf32>
    %17 = vector.shape_cast %16 : vector<1x16x16xf32> to vector<16x16xf32>
    %cst_19 = arith.constant dense<0.000000e+00> : vector<16x32xf32>
    %18 = tpu.matmul %17, %0, %cst_19 {dimension_numbers = #tpu.dot_dimension_numbers<[1], [0], [0], [1], [0, 0, 1, 1], [], []>} : vector<16x16xf32>, vector<16x32xf32>, vector<16x32xf32> -> vector<16x32xf32>
    %cst_20 = arith.constant dense<0.000000e+00> : vector<32x32xf32>
    %19 = tpu.matmul %1, %18, %cst_20 {dimension_numbers = #tpu.dot_dimension_numbers<[1], [0], [0], [1], [0, 0, 1, 1], [], []>} : vector<32x16xf32>, vector<16x32xf32>, vector<32x32xf32> -> vector<32x32xf32>
    %c2_21 = arith.constant 2 : index
    %c0_22 = arith.constant 0 : index
    %c0_23 = arith.constant 0 : index
    %20 = vector.load %arg4[%c2_21, %c0_22, %c0_23] : memref<4x32x32xf32, #tpu.memory_space<vmem>>, vector<1x32x32xf32>
    %21 = vector.shape_cast %20 : vector<1x32x32xf32> to vector<32x32xf32>
    %22 = vector.shape_cast %19 : vector<32x32xf32> to vector<1x32x32xf32>
    tpu.vector_store %arg4[%c2_21, %c0_22, %c0_23], %22 {strides = array<i32>} : memref<4x32x32xf32, #tpu.memory_space<vmem>>, vector<1x32x32xf32>,
    %c3 = arith.constant 3 : index
    %c0_24 = arith.constant 0 : index
    %c0_25 = arith.constant 0 : index
    %23 = vector.load %arg1[%c3, %c0_24, %c0_25] : memref<4x16x16xf32, #tpu.memory_space<vmem>>, vector<1x16x16xf32>
    %24 = vector.shape_cast %23 : vector<1x16x16xf32> to vector<16x16xf32>
    %cst_26 = arith.constant dense<0.000000e+00> : vector<16x32xf32>
    %25 = tpu.matmul %24, %0, %cst_26 {dimension_numbers = #tpu.dot_dimension_numbers<[1], [0], [0], [1], [0, 0, 1, 1], [], []>} : vector<16x16xf32>, vector<16x32xf32>, vector<16x32xf32> -> vector<16x32xf32>
    %cst_27 = arith.constant dense<0.000000e+00> : vector<32x32xf32>
    %26 = tpu.matmul %1, %25, %cst_27 {dimension_numbers = #tpu.dot_dimension_numbers<[1], [0], [0], [1], [0, 0, 1, 1], [], []>} : vector<32x16xf32>, vector<16x32xf32>, vector<32x32xf32> -> vector<32x32xf32>
    %c3_28 = arith.constant 3 : index
    %c0_29 = arith.constant 0 : index
    %c0_30 = arith.constant 0 : index
    %27 = vector.load %arg4[%c3_28, %c0_29, %c0_30] : memref<4x32x32xf32, #tpu.memory_space<vmem>>, vector<1x32x32xf32>
    %28 = vector.shape_cast %27 : vector<1x32x32xf32> to vector<32x32xf32>
    %29 = vector.shape_cast %26 : vector<32x32xf32> to vector<1x32x32xf32>
    tpu.vector_store %arg4[%c3_28, %c0_29, %c0_30], %29 {strides = array<i32>} : memref<4x32x32xf32, #tpu.memory_space<vmem>>, vector<1x32x32xf32>,
    return
  }
  func.func @transform_0(%arg0: i32) -> (i32, i32, i32) {
    %c0_i32 = arith.constant 0 : i32
    %c0_i32_0 = arith.constant 0 : i32
    %c0_i32_1 = arith.constant 0 : i32
    return %arg0, %c0_i32, %c0_i32_0 : i32, i32, i32
  }
  func.func @transform_1(%arg0: i32) -> (i32, i32) {
    %c0_i32 = arith.constant 0 : i32
    %c0_i32_0 = arith.constant 0 : i32
    %c0_i32_1 = arith.constant 0 : i32
    return %c0_i32, %c0_i32_0 : i32, i32
  }
  func.func @transform_2(%arg0: i32) -> (i32, i32) {
    %c0_i32 = arith.constant 0 : i32
    %c0_i32_0 = arith.constant 0 : i32
    %c0_i32_1 = arith.constant 0 : i32
    return %c0_i32, %c0_i32_0 : i32, i32
  }
  func.func @transform_3(%arg0: i32) -> (i32, i32, i32) {
    %c0_i32 = arith.constant 0 : i32
    %c0_i32_0 = arith.constant 0 : i32
    %c0_i32_1 = arith.constant 0 : i32
    return %arg0, %c0_i32, %c0_i32_0 : i32, i32, i32
  }
}

</mosaic_0001>

<llo_original>
// kernel: tpu_custom_call.1
$region0: #{tpu_custom_call.1}
  #allocation0 [shape = 'u32[]', space=smem, size = 0x4, offset = 0x4, fixed_abs, tag = 'smem constant byte address 0x4 - core index']
  #allocation1 [shape = 'u32[144,128]{1,0:T(1,128)}', space=vmem, size = 0x12000, scoped, tag = 'internal scratch']
  %s0 = inlined_call_operand.hbm [shape: f32[8,16,16], index: 0, kind: input, shape index: {}]
  %s1 = inlined_call_operand.vmem [shape: f32[16,32], index: 1, kind: input, shape index: {}]
  %s2 = inlined_call_operand.vmem [shape: f32[32,16], index: 2, kind: input, shape index: {}]
  %s3 = inlined_call_operand.hbm [shape: f32[8,32,32], index: 3, kind: output, shape index: {}]
  %s4 = sld [smem:[#allocation0]]
  $region49: #{tpu_custom_call.1} parent=0
    _
  %s6 = ssub.s32 1, %s4
  %s7 = scalar_select 0, %s6, %s4
  $region1: #{tpu_custom_call.1} parent=0
    #allocation2 [shape = 'u8[65536]{0}', space=vmem, size = 0x10000, scoped, tag = 'input window, operand 0']
    #allocation3 [shape = 's32[2]{0}', space=sflag, size = 0x8, scoped, tag = 'scoped memory for tpu_custom_call.1']
    #allocation4 [shape = 's32[2]{0}', space=sflag, size = 0x8, scoped, tag = 'scoped memory for tpu_custom_call.1']
    #allocation5 [shape = 'u8[131072]{0}', space=vmem, size = 0x20000, scoped, tag = 'output window, operand 0']
    %8 = vsyncpa [#allocation3], 0
    %s9 = scalar_lea.sflag [#allocation3], 1
    %10 = vsyncpa %s9, 0
    %11 = vsyncpa [#allocation4], 0
    %s12 = scalar_lea.sflag [#allocation4], 1
    %13 = vsyncpa %s12, 0
    loop: start=0, step=1, limit=4
    $region2: #{tpu_custom_call.1} parent=1 // loop_pre_header
      _
    $region3: #{tpu_custom_call.1} parent=1 // loop_header
      %s15 = sphi 0, %s19
      %p16 = scmp.ge.s32.totalorder %s15, 4
      %s25 = sphi 0, %s27
      %s28 = sphi 0, %s25
      %s29 = sphi 0, %s28
      %s45 = sphi 0, %s29
      %s49 = sphi 0, %s49
      %s51 = sphi 0, %s49
      %s52 = sphi 0, %s51
      %s66 = sphi 0, %s52
      %s70 = sphi 0, %s70
      %s72 = sphi 0, %s70
      %s73 = sphi 0, %s72
      %s87 = sphi 0, %s73
      %s93 = sphi 0, %s95
      %s96 = sphi 0, %s93
      %s97 = sphi 0, %s96
      %s113 = sphi 0, %s97
    $region4: #{tpu_custom_call.1} parent=1 // loop_header_branch
      %18 = sbr.rel (%p16) target = $region8
    $region5: #{tpu_custom_call.1} parent=1 // loop_body
      %s20 = ssub.s32 %s15, 1
      %s21 = ssub.s32 %s15, 2
      %s22 = sadd.s32 %s15, 1
      %s23 = ssub.s32 %s15, %s22
      %p24 = scmp.eq.s32.totalorder %s23, 0
      %s26 = sadd.s32 %s25, 1
      %s27 = scalar_select %p24, %s25, %s26
      %p30 = pneg %p24
      %p31 = scmp.eq.s32.totalorder %s15, 1
      %p32 = por %p30, %p31
      %p33 = scmp.ne.s32.totalorder %s25, %s28
      %p34 = scmp.eq.s32.totalorder %s15, 0
      %p35 = por %p33, %p34
      %p36 = scmp.ne.s32.totalorder %s25, %s28
      %p37 = scmp.eq.s32.totalorder %s20, 1
      %p38 = por %p36, %p37
      %p39 = scmp.ne.s32.totalorder %s28, %s29
      %p40 = scmp.eq.s32.totalorder %s20, 0
      %p41 = por %p39, %p40
      %p42 = scmp.ne.s32.totalorder %s28, %s29
      %p43 = scmp.eq.s32.totalorder %s21, 1
      %p44 = por %p42, %p43
      %p46 = scmp.ne.s32.totalorder %s29, %s45
      %p47 = scmp.eq.s32.totalorder %s21, 0
      %p48 = por %p46, %p47
      %s50 = sadd.s32 %s49, 1
      %p53 = scmp.eq.s32.totalorder %s15, 1
      %p54 = scmp.ne.s32.totalorder %s49, %s51
      %p55 = scmp.eq.s32.totalorder %s15, 0
      %p56 = por %p54, %p55
      %p57 = scmp.ne.s32.totalorder %s49, %s51
      %p58 = scmp.eq.s32.totalorder %s20, 1
      %p59 = por %p57, %p58
      %p60 = scmp.ne.s32.totalorder %s51, %s52
      %p61 = scmp.eq.s32.totalorder %s20, 0
      %p62 = por %p60, %p61
      %p63 = scmp.ne.s32.totalorder %s51, %s52
      %p64 = scmp.eq.s32.totalorder %s21, 1
      %p65 = por %p63, %p64
      %p67 = scmp.ne.s32.totalorder %s52, %s66
      %p68 = scmp.eq.s32.totalorder %s21, 0
      %p69 = por %p67, %p68
      %s71 = sadd.s32 %s70, 1
      %p74 = scmp.eq.s32.totalorder %s15, 1
      %p75 = scmp.ne.s32.totalorder %s70, %s72
      %p76 = scmp.eq.s32.totalorder %s15, 0
      %p77 = por %p75, %p76
      %p78 = scmp.ne.s32.totalorder %s70, %s72
      %p79 = scmp.eq.s32.totalorder %s20, 1
      %p80 = por %p78, %p79
      %p81 = scmp.ne.s32.totalorder %s72, %s73
      %p82 = scmp.eq.s32.totalorder %s20, 0
      %p83 = por %p81, %p82
      %p84 = scmp.ne.s32.totalorder %s72, %s73
      %p85 = scmp.eq.s32.totalorder %s21, 1
      %p86 = por %p84, %p85
      %p88 = scmp.ne.s32.totalorder %s73, %s87
      %p89 = scmp.eq.s32.totalorder %s21, 0
      %p90 = por %p88, %p89
      %s91 = ssub.s32 %s15, %s22
      %p92 = scmp.eq.s32.totalorder %s91, 0
      %s94 = sadd.s32 %s93, 1
      %s95 = scalar_select %p92, %s93, %s94
      %p98 = pneg %p92
      %p99 = scmp.eq.s32.totalorder %s15, 1
      %p100 = por %p98, %p99
      %p101 = scmp.ne.s32.totalorder %s93, %s96
      %p102 = scmp.eq.s32.totalorder %s15, 0
      %p103 = por %p101, %p102
      %p104 = scmp.ne.s32.totalorder %s93, %s96
      %p105 = scmp.eq.s32.totalorder %s20, 1
      %p106 = por %p104, %p105
      %p107 = scmp.ne.s32.totalorder %s96, %s97
      %p108 = scmp.eq.s32.totalorder %s20, 0
      %p109 = por %p107, %p108
      %p110 = scmp.ne.s32.totalorder %s96, %s97
      %p111 = scmp.eq.s32.totalorder %s21, 1
      %p112 = por %p110, %p111
      %p114 = scmp.ne.s32.totalorder %s97, %s113
      %p115 = scmp.eq.s32.totalorder %s21, 0
      %p116 = por %p114, %p115
      %p117 = scmp.le.s32.totalorder 1, %s15
      %p118 = scmp.lt.s32.totalorder %s15, 3
      %p119 = pnand %p117, %p118
      %p120 = pneg %p119
      // Predicated region
      $region9: #{tpu_custom_call.1} parent=5 // pred_check
        _
      $region10: #{tpu_custom_call.1} parent=5 // pred_check_branch
        %122 = sbr.rel (%p119) target = $region12
      $region11: #{tpu_custom_call.1} parent=5 // pred_region
        %s123 = ssub.s32 %s15, 1
        // Predicated region
        $region13: #{tpu_custom_call.1} parent=11 // pred_check
          %p124 = pneg %p62
        $region14: #{tpu_custom_call.1} parent=11 // pred_check_branch
          %126 = sbr.rel (%p124) target = $region16
        $region15: #{tpu_custom_call.1} parent=11 // pred_region
          _
        $region16: #{tpu_custom_call.1} parent=11 // pred_fallthru
          _
        // Predicated region
        $region17: #{tpu_custom_call.1} parent=11 // pred_check
          %p127 = pneg %p83
        $region18: #{tpu_custom_call.1} parent=11 // pred_check_branch
          %129 = sbr.rel (%p127) target = $region20
        $region19: #{tpu_custom_call.1} parent=11 // pred_region
          _
        $region20: #{tpu_custom_call.1} parent=11 // pred_fallthru
          _
      $region12: #{tpu_custom_call.1} parent=5 // pred_fallthru
        _
      %p130 = scmp.lt.s32.totalorder %s15, 2
      // Predicated region
      $region21: #{tpu_custom_call.1} parent=5 // pred_check
        %p131 = pneg %p130
      $region22: #{tpu_custom_call.1} parent=5 // pred_check_branch
        %133 = sbr.rel (%p131) target = $region24
      $region23: #{tpu_custom_call.1} parent=5 // pred_region
        // Predicated region
        $region25: #{tpu_custom_call.1} parent=23 // pred_check
          %p134 = pneg %p35
        $region26: #{tpu_custom_call.1} parent=23 // pred_check_branch
          %136 = sbr.rel (%p134) target = $region28
        $region27: #{tpu_custom_call.1} parent=23 // pred_region
          %s137 = sand.u32 %s25, 1
          %s138 = scalar_lea.sflag [#allocation3], %s137
          %s139 = sand.u32 %s25, 1
          %s140 = smul.addr %s139, 64
          %s141 = scalar_lea.vmem [#allocation2], %s140
          %s142 = smul.u32 4, %s15
          %s144 = ssub.s32 1024, 1024
          %145 = vsyncadd %s138, %s144
          %s146 = smul.addr %s142, 2
          %s147 = smul.addr %s146, 128
          %s148 = scalar_lea.hbm %s0, %s147
          %s149 = sshll.u32 %s141, 4
          %s150 = int_to_ptr.vmem [resolvable:$true] %s149
          %155 = dma.hbm_to_vmem [thread:$0]  %s148, 1024, %s150, %s138, 128, 128, 8
        $region28: #{tpu_custom_call.1} parent=23 // pred_fallthru
          _
      $region24: #{tpu_custom_call.1} parent=5 // pred_fallthru
        _
      %p156 = scmp.le.s32.totalorder 1, %s15
      %p157 = scmp.lt.s32.totalorder %s15, 3
      %p158 = pnand %p156, %p157
      %p159 = pneg %p158
      // Predicated region
      $region29: #{tpu_custom_call.1} parent=5 // pred_check
        _
      $region30: #{tpu_custom_call.1} parent=5 // pred_check_branch
        %161 = sbr.rel (%p158) target = $region32
      $region31: #{tpu_custom_call.1} parent=5 // pred_region
        %s162 = ssub.s32 %s15, 1
        %s163 = sand.u32 %s28, 1
        %s164 = scalar_lea.sflag [#allocation3], %s163
        %s165 = sand.u32 %s28, 1
        %s166 = smul.addr %s165, 64
        %s167 = scalar_lea.vmem [#allocation2], %s166
        // Predicated region
        $region33: #{tpu_custom_call.1} parent=31 // pred_check
          %p168 = pneg %p41
        $region34: #{tpu_custom_call.1} parent=31 // pred_check_branch
          %170 = sbr.rel (%p168) target = $region36
        $region35: #{tpu_custom_call.1} parent=31 // pred_region
          %171 = dma.done %s164, 1024
        $region36: #{tpu_custom_call.1} parent=31 // pred_fallthru
          _
        %s172 = sand.u32 %s28, 1
        %s173 = scalar_lea.sflag [#allocation3], %s172
        %s174 = sand.u32 %s28, 1
        %s175 = smul.addr %s174, 64
        %s176 = scalar_lea.vmem [#allocation2], %s175
        %p177 = pneg %p41
        %p178 = pneg %p38
        %p179 = pneg %p62
        %p180 = pneg %p59
        %p181 = pneg %p83
        %p182 = pneg %p80
        %p183 = pneg %p109
        %p184 = pneg %p106
        %s185 = sand.u32 %s96, 1
        %s186 = scalar_lea.sflag [#allocation4], %s185
        %s187 = sand.u32 %s96, 1
        %s188 = smul.addr %s187, 128
        %s189 = scalar_lea.vmem [#allocation5], %s188
        %s190 = smul.u32 4, %s20
        %s191 = smul.u32 4, %s20
        %v192 = vld [vmem:[%s1] sm:$0xff]
        %v193 = vld [vmem:[%s1 + $0x8] sm:$0xff]
        %v194 = vld [vmem:[%s2] sm:$0xff]
        %v195 = vld [vmem:[%s2 + $0x8] sm:$0xff]
        %v196 = vld [vmem:[%s2 + $0x10] sm:$0xff]
        %v197 = vld [vmem:[%s2 + $0x18] sm:$0xff]
        %v198 = vld [vmem:[%s167] sm:$0xff]
        %v199 = vld [vmem:[%s167 + $0x8] sm:$0xff]
        %vm200 = vcmask 130048
        %v202 = vsel %vm200, %v198, 0
        %v205 = vsel %vm200, %v199, 0
        %207 = vmatprep.subr.mxu0 0.0
        %208 = vmatpush1.msra.mxu0 0.0
        %209 = vmatprep.subr.mxu0 0.0
        %210 = vmatpush1.msra.mxu0 0.0
        %211 = vmatprep.subr.mxu0 0.0
        %212 = vmatpush1.msra.mxu0 0.0
        %213 = vmatprep.subr.mxu0 0.0
        %214 = vmatpush1.msra.mxu0 0.0
        %215 = vmatprep.subr.mxu0 0.0
        %216 = vmatpush1.msra.mxu0 0.0
        %217 = vmatprep.subr.mxu0 0.0
        %218 = vmatpush1.msra.mxu0 0.0
        %219 = vmatprep.subr.mxu0 0.0
        %220 = vmatpush1.msra.mxu0 0.0
        %221 = vmatprep.subr.mxu0 0.0
        %222 = vmatpush1.msra.mxu0 0.0
        %223 = vmatprep.subr.mxu0 0.0
        %224 = vmatpush1.msra.mxu0 0.0
        %225 = vmatprep.subr.mxu0 0.0
        %226 = vmatpush1.msra.mxu0 0.0
        %227 = vmatprep.subr.mxu0 0.0
        %228 = vmatpush1.msra.mxu0 0.0
        %229 = vmatprep.subr.mxu0 0.0
        %230 = vmatpush1.msra.mxu0 0.0
        %231 = vmatprep.subr.mxu0 0.0
        %232 = vmatpush1.msra.mxu0 0.0
        %233 = vmatprep.subr.mxu0 0.0
        %234 = vmatpush1.msra.mxu0 0.0
        %235 = vmatprep.subr.mxu0 0.0
        %236 = vmatpush1.msra.mxu0 %v193
        %237 = vmatprep.subr.mxu0 0.0
        %238 = vmatpush1.msra.mxu0 %v192
        %239 = vmatprep.subr.mxu0 0.0
        %240 = vmatpush2.msra.mxu0 0.0
        %241 = vmatprep.subr.mxu0 0.0
        %242 = vmatpush2.msra.mxu0 0.0
        %243 = vmatprep.subr.mxu0 0.0
        %244 = vmatpush2.msra.mxu0 0.0
        %245 = vmatprep.subr.mxu0 0.0
        %246 = vmatpush2.msra.mxu0 0.0
        %247 = vmatprep.subr.mxu0 0.0
        %248 = vmatpush2.msra.mxu0 0.0
        %249 = vmatprep.subr.mxu0 0.0
        %250 = vmatpush2.msra.mxu0 0.0
        %251 = vmatprep.subr.mxu0 0.0
        %252 = vmatpush2.msra.mxu0 0.0
        %253 = vmatprep.subr.mxu0 0.0
        %254 = vmatpush2.msra.mxu0 0.0
        %255 = vmatprep.subr.mxu0 0.0
        %256 = vmatpush2.msra.mxu0 0.0
        %257 = vmatprep.subr.mxu0 0.0
        %258 = vmatpush2.msra.mxu0 0.0
        %259 = vmatprep.subr.mxu0 0.0
        %260 = vmatpush2.msra.mxu0 0.0
        %261 = vmatprep.subr.mxu0 0.0
        %262 = vmatpush2.msra.mxu0 0.0
        %263 = vmatprep.subr.mxu0 0.0
        %264 = vmatpush2.msra.mxu0 0.0
        %265 = vmatprep.subr.mxu0 0.0
        %266 = vmatpush2.msra.mxu0 0.0
        %267 = vmatprep.subr.mxu0 0.0
        %268 = vmatpush2.msra.mxu0 0.0
        %269 = vmatprep.subr.mxu0 0.0
        %270 = vmatpush2.msra.mxu0 0.0
        %271 = vmatprep.mubr.f32.mxu0 0.0
        %272 = vmatmul.mubr.f32.gmra.mxu0 %v202
        %v273 = vpop.f32.mrf.mxu0
        %v274 = vadd.f32 0.0, %v273
        %v275 = vpop.f32.mrf.mxu0
        %276 = vmatprep.mubr.f32.mxu0 0.0
        %277 = vmatmul.mubr.f32.gmra.mxu0 %v205
        %v278 = vpop.f32.mrf.mxu0
        %v279 = vadd.f32 0.0, %v278
        %v280 = vpop.f32.mrf.mxu0
        %281 = vdwg.mxu0
        %v283 = vsel %vm200, %v194, 0
        %v286 = vsel %vm200, %v195, 0
        %v289 = vsel %vm200, %v196, 0
        %v292 = vsel %vm200, %v197, 0
        %294 = vmatprep.subr.mxu0 0.0
        %295 = vmatpush1.msra.mxu0 0.0
        %296 = vmatprep.subr.mxu0 0.0
        %297 = vmatpush1.msra.mxu0 0.0
        %298 = vmatprep.subr.mxu0 0.0
        %299 = vmatpush1.msra.mxu0 0.0
        %300 = vmatprep.subr.mxu0 0.0
        %301 = vmatpush1.msra.mxu0 0.0
        %302 = vmatprep.subr.mxu0 0.0
        %303 = vmatpush1.msra.mxu0 0.0
        %304 = vmatprep.subr.mxu0 0.0
        %305 = vmatpush1.msra.mxu0 0.0
        %306 = vmatprep.subr.mxu0 0.0
        %307 = vmatpush1.msra.mxu0 0.0
        %308 = vmatprep.subr.mxu0 0.0
        %309 = vmatpush1.msra.mxu0 0.0
        %310 = vmatprep.subr.mxu0 0.0
        %311 = vmatpush1.msra.mxu0 0.0
        %312 = vmatprep.subr.mxu0 0.0
        %313 = vmatpush1.msra.mxu0 0.0
        %314 = vmatprep.subr.mxu0 0.0
        %315 = vmatpush1.msra.mxu0 0.0
        %316 = vmatprep.subr.mxu0 0.0
        %317 = vmatpush1.msra.mxu0 0.0
        %318 = vmatprep.subr.mxu0 0.0
        %319 = vmatpush1.msra.mxu0 0.0
        %320 = vmatprep.subr.mxu0 0.0
        %321 = vmatpush1.msra.mxu0 0.0
        %322 = vmatprep.subr.mxu0 0.0
        %323 = vmatpush1.msra.mxu0 %v279
        %324 = vmatprep.subr.mxu0 0.0
        %325 = vmatpush1.msra.mxu0 %v274
        %326 = vmatprep.subr.mxu0 0.0
        %327 = vmatpush2.msra.mxu0 0.0
        %328 = vmatprep.subr.mxu0 0.0
        %329 = vmatpush2.msra.mxu0 0.0
        %330 = vmatprep.subr.mxu0 0.0
        %331 = vmatpush2.msra.mxu0 0.0
        %332 = vmatprep.subr.mxu0 0.0
        %333 = vmatpush2.msra.mxu0 0.0
        %334 = vmatprep.subr.mxu0 0.0
        %335 = vmatpush2.msra.mxu0 0.0
        %336 = vmatprep.subr.mxu0 0.0
        %337 = vmatpush2.msra.mxu0 0.0
        %338 = vmatprep.subr.mxu0 0.0
        %339 = vmatpush2.msra.mxu0 0.0
        %340 = vmatprep.subr.mxu0 0.0
        %341 = vmatpush2.msra.mxu0 0.0
        %342 = vmatprep.subr.mxu0 0.0
        %343 = vmatpush2.msra.mxu0 0.0
        %344 = vmatprep.subr.mxu0 0.0
        %345 = vmatpush2.msra.mxu0 0.0
        %346 = vmatprep.subr.mxu0 0.0
        %347 = vmatpush2.msra.mxu0 0.0
        %348 = vmatprep.subr.mxu0 0.0
        %349 = vmatpush2.msra.mxu0 0.0
        %350 = vmatprep.subr.mxu0 0.0
        %351 = vmatpush2.msra.mxu0 0.0
        %352 = vmatprep.subr.mxu0 0.0
        %353 = vmatpush2.msra.mxu0 0.0
        %354 = vmatprep.subr.mxu0 0.0
        %355 = vmatpush2.msra.mxu0 0.0
        %356 = vmatprep.subr.mxu0 0.0
        %357 = vmatpush2.msra.mxu0 0.0
        %358 = vmatprep.mubr.f32.mxu0 0.0
        %359 = vmatmul.mubr.f32.gmra.mxu0 %v283
        %v360 = vpop.f32.mrf.mxu0
        %v361 = vadd.f32 0.0, %v360
        %v362 = vpop.f32.mrf.mxu0
        %363 = vmatprep.mubr.f32.mxu0 0.0
        %364 = vmatmul.mubr.f32.gmra.mxu0 %v286
        %v365 = vpop.f32.mrf.mxu0
        %v366 = vadd.f32 0.0, %v365
        %v367 = vpop.f32.mrf.mxu0
        %368 = vmatprep.mubr.f32.mxu0 0.0
        %369 = vmatmul.mubr.f32.gmra.mxu0 %v289
        %v370 = vpop.f32.mrf.mxu0
        %v371 = vadd.f32 0.0, %v370
        %v372 = vpop.f32.mrf.mxu0
        %373 = vmatprep.mubr.f32.mxu0 0.0
        %374 = vmatmul.mubr.f32.gmra.mxu0 %v292
        %v375 = vpop.f32.mrf.mxu0
        %v376 = vadd.f32 0.0, %v375
        %v377 = vpop.f32.mrf.mxu0
        %378 = vdwg.mxu0
        %vm379 = vcmask 261120
        %380 = vst.msk [vmem:[%s189] sm:$0xff] %vm379, %v361
        %381 = vst.msk [vmem:[%s189 + $0x8] sm:$0xff] %vm379, %v366
        %382 = vst.msk [vmem:[%s189 + $0x10] sm:$0xff] %vm379, %v371
        %383 = vst.msk [vmem:[%s189 + $0x18] sm:$0xff] %vm379, %v376
        %s384 = scalar_lea.vmem %s167, 16 [#allocation2]
        %v385 = vld [vmem:[%s384] sm:$0xff]
        %v386 = vld [vmem:[%s384 + $0x8] sm:$0xff]
        %v388 = vsel %vm200, %v385, 0
        %v391 = vsel %vm200, %v386, 0
        %393 = vmatprep.subr.mxu0 0.0
        %394 = vmatpush1.msra.mxu0 0.0
        %395 = vmatprep.subr.mxu0 0.0
        %396 = vmatpush1.msra.mxu0 0.0
        %397 = vmatprep.subr.mxu0 0.0
        %398 = vmatpush1.msra.mxu0 0.0
        %399 = vmatprep.subr.mxu0 0.0
        %400 = vmatpush1.msra.mxu0 0.0
        %401 = vmatprep.subr.mxu0 0.0
        %402 = vmatpush1.msra.mxu0 0.0
        %403 = vmatprep.subr.mxu0 0.0
        %404 = vmatpush1.msra.mxu0 0.0
        %405 = vmatprep.subr.mxu0 0.0
        %406 = vmatpush1.msra.mxu0 0.0
        %407 = vmatprep.subr.mxu0 0.0
        %408 = vmatpush1.msra.mxu0 0.0
        %409 = vmatprep.subr.mxu0 0.0
        %410 = vmatpush1.msra.mxu0 0.0
        %411 = vmatprep.subr.mxu0 0.0
        %412 = vmatpush1.msra.mxu0 0.0
        %413 = vmatprep.subr.mxu0 0.0
        %414 = vmatpush1.msra.mxu0 0.0
        %415 = vmatprep.subr.mxu0 0.0
        %416 = vmatpush1.msra.mxu0 0.0
        %417 = vmatprep.subr.mxu0 0.0
        %418 = vmatpush1.msra.mxu0 0.0
        %419 = vmatprep.subr.mxu0 0.0
        %420 = vmatpush1.msra.mxu0 0.0
        %421 = vmatprep.subr.mxu0 0.0
        %422 = vmatpush1.msra.mxu0 %v193
        %423 = vmatprep.subr.mxu0 0.0
        %424 = vmatpush1.msra.mxu0 %v192
        %425 = vmatprep.subr.mxu0 0.0
        %426 = vmatpush2.msra.mxu0 0.0
        %427 = vmatprep.subr.mxu0 0.0
        %428 = vmatpush2.msra.mxu0 0.0
        %429 = vmatprep.subr.mxu0 0.0
        %430 = vmatpush2.msra.mxu0 0.0
        %431 = vmatprep.subr.mxu0 0.0
        %432 = vmatpush2.msra.mxu0 0.0
        %433 = vmatprep.subr.mxu0 0.0
        %434 = vmatpush2.msra.mxu0 0.0
        %435 = vmatprep.subr.mxu0 0.0
        %436 = vmatpush2.msra.mxu0 0.0
        %437 = vmatprep.subr.mxu0 0.0
        %438 = vmatpush2.msra.mxu0 0.0
        %439 = vmatprep.subr.mxu0 0.0
        %440 = vmatpush2.msra.mxu0 0.0
        %441 = vmatprep.subr.mxu0 0.0
        %442 = vmatpush2.msra.mxu0 0.0
        %443 = vmatprep.subr.mxu0 0.0
        %444 = vmatpush2.msra.mxu0 0.0
        %445 = vmatprep.subr.mxu0 0.0
        %446 = vmatpush2.msra.mxu0 0.0
        %447 = vmatprep.subr.mxu0 0.0
        %448 = vmatpush2.msra.mxu0 0.0
        %449 = vmatprep.subr.mxu0 0.0
        %450 = vmatpush2.msra.mxu0 0.0
        %451 = vmatprep.subr.mxu0 0.0
        %452 = vmatpush2.msra.mxu0 0.0
        %453 = vmatprep.subr.mxu0 0.0
        %454 = vmatpush2.msra.mxu0 0.0
        %455 = vmatprep.subr.mxu0 0.0
        %456 = vmatpush2.msra.mxu0 0.0
        %457 = vmatprep.mubr.f32.mxu0 0.0
        %458 = vmatmul.mubr.f32.gmra.mxu0 %v388
        %v459 = vpop.f32.mrf.mxu0
        %v460 = vadd.f32 0.0, %v459
        %v461 = vpop.f32.mrf.mxu0
        %462 = vmatprep.mubr.f32.mxu0 0.0
        %463 = vmatmul.mubr.f32.gmra.mxu0 %v391
        %v464 = vpop.f32.mrf.mxu0
        %v465 = vadd.f32 0.0, %v464
        %v466 = vpop.f32.mrf.mxu0
        %467 = vdwg.mxu0
        %468 = vmatprep.subr.mxu0 0.0
        %469 = vmatpush1.msra.mxu0 0.0
        %470 = vmatprep.subr.mxu0 0.0
        %471 = vmatpush1.msra.mxu0 0.0
        %472 = vmatprep.subr.mxu0 0.0
        %473 = vmatpush1.msra.mxu0 0.0
        %474 = vmatprep.subr.mxu0 0.0
        %475 = vmatpush1.msra.mxu0 0.0
        %476 = vmatprep.subr.mxu0 0.0
        %477 = vmatpush1.msra.mxu0 0.0
        %478 = vmatprep.subr.mxu0 0.0
        %479 = vmatpush1.msra.mxu0 0.0
        %480 = vmatprep.subr.mxu0 0.0
        %481 = vmatpush1.msra.mxu0 0.0
        %482 = vmatprep.subr.mxu0 0.0
        %483 = vmatpush1.msra.mxu0 0.0
        %484 = vmatprep.subr.mxu0 0.0
        %485 = vmatpush1.msra.mxu0 0.0
        %486 = vmatprep.subr.mxu0 0.0
        %487 = vmatpush1.msra.mxu0 0.0
        %488 = vmatprep.subr.mxu0 0.0
        %489 = vmatpush1.msra.mxu0 0.0
        %490 = vmatprep.subr.mxu0 0.0
        %491 = vmatpush1.msra.mxu0 0.0
        %492 = vmatprep.subr.mxu0 0.0
        %493 = vmatpush1.msra.mxu0 0.0
        %494 = vmatprep.subr.mxu0 0.0
        %495 = vmatpush1.msra.mxu0 0.0
        %496 = vmatprep.subr.mxu0 0.0
        %497 = vmatpush1.msra.mxu0 %v465
        %498 = vmatprep.subr.mxu0 0.0
        %499 = vmatpush1.msra.mxu0 %v460
        %500 = vmatprep.subr.mxu0 0.0
        %501 = vmatpush2.msra.mxu0 0.0
        %502 = vmatprep.subr.mxu0 0.0
        %503 = vmatpush2.msra.mxu0 0.0
        %504 = vmatprep.subr.mxu0 0.0
        %505 = vmatpush2.msra.mxu0 0.0
        %506 = vmatprep.subr.mxu0 0.0
        %507 = vmatpush2.msra.mxu0 0.0
        %508 = vmatprep.subr.mxu0 0.0
        %509 = vmatpush2.msra.mxu0 0.0
        %510 = vmatprep.subr.mxu0 0.0
        %511 = vmatpush2.msra.mxu0 0.0
        %512 = vmatprep.subr.mxu0 0.0
        %513 = vmatpush2.msra.mxu0 0.0
        %514 = vmatprep.subr.mxu0 0.0
        %515 = vmatpush2.msra.mxu0 0.0
        %516 = vmatprep.subr.mxu0 0.0
        %517 = vmatpush2.msra.mxu0 0.0
        %518 = vmatprep.subr.mxu0 0.0
        %519 = vmatpush2.msra.mxu0 0.0
        %520 = vmatprep.subr.mxu0 0.0
        %521 = vmatpush2.msra.mxu0 0.0
        %522 = vmatprep.subr.mxu0 0.0
        %523 = vmatpush2.msra.mxu0 0.0
        %524 = vmatprep.subr.mxu0 0.0
        %525 = vmatpush2.msra.mxu0 0.0
        %526 = vmatprep.subr.mxu0 0.0
        %527 = vmatpush2.msra.mxu0 0.0
        %528 = vmatprep.subr.mxu0 0.0
        %529 = vmatpush2.msra.mxu0 0.0
        %530 = vmatprep.subr.mxu0 0.0
        %531 = vmatpush2.msra.mxu0 0.0
        %532 = vmatprep.mubr.f32.mxu0 0.0
        %533 = vmatmul.mubr.f32.gmra.mxu0 %v283
        %v534 = vpop.f32.mrf.mxu0
        %v535 = vadd.f32 0.0, %v534
        %v536 = vpop.f32.mrf.mxu0
        %537 = vmatprep.mubr.f32.mxu0 0.0
        %538 = vmatmul.mubr.f32.gmra.mxu0 %v286
        %v539 = vpop.f32.mrf.mxu0
        %v540 = vadd.f32 0.0, %v539
        %v541 = vpop.f32.mrf.mxu0
        %542 = vmatprep.mubr.f32.mxu0 0.0
        %543 = vmatmul.mubr.f32.gmra.mxu0 %v289
        %v544 = vpop.f32.mrf.mxu0
        %v545 = vadd.f32 0.0, %v544
        %v546 = vpop.f32.mrf.mxu0
        %547 = vmatprep.mubr.f32.mxu0 0.0
        %548 = vmatmul.mubr.f32.gmra.mxu0 %v292
        %v549 = vpop.f32.mrf.mxu0
        %v550 = vadd.f32 0.0, %v549
        %v551 = vpop.f32.mrf.mxu0
        %552 = vdwg.mxu0
        %s553 = scalar_lea.vmem %s189, 32 [#allocation5]
        %554 = vst.msk [vmem:[%s553] sm:$0xff] %vm379, %v535
        %555 = vst.msk [vmem:[%s553 + $0x8] sm:$0xff] %vm379, %v540
        %556 = vst.msk [vmem:[%s553 + $0x10] sm:$0xff] %vm379, %v545
        %557 = vst.msk [vmem:[%s553 + $0x18] sm:$0xff] %vm379, %v550
        %s558 = scalar_lea.vmem %s167, 32 [#allocation2]
        %v559 = vld [vmem:[%s558] sm:$0xff]
        %v560 = vld [vmem:[%s558 + $0x8] sm:$0xff]
        %v562 = vsel %vm200, %v559, 0
        %v565 = vsel %vm200, %v560, 0
        %567 = vmatprep.subr.mxu0 0.0
        %568 = vmatpush1.msra.mxu0 0.0
        %569 = vmatprep.subr.mxu0 0.0
        %570 = vmatpush1.msra.mxu0 0.0
        %571 = vmatprep.subr.mxu0 0.0
        %572 = vmatpush1.msra.mxu0 0.0
        %573 = vmatprep.subr.mxu0 0.0
        %574 = vmatpush1.msra.mxu0 0.0
        %575 = vmatprep.subr.mxu0 0.0
        %576 = vmatpush1.msra.mxu0 0.0
        %577 = vmatprep.subr.mxu0 0.0
        %578 = vmatpush1.msra.mxu0 0.0
        %579 = vmatprep.subr.mxu0 0.0
        %580 = vmatpush1.msra.mxu0 0.0
        %581 = vmatprep.subr.mxu0 0.0
        %582 = vmatpush1.msra.mxu0 0.0
        %583 = vmatprep.subr.mxu0 0.0
        %584 = vmatpush1.msra.mxu0 0.0
        %585 = vmatprep.subr.mxu0 0.0
        %586 = vmatpush1.msra.mxu0 0.0
        %587 = vmatprep.subr.mxu0 0.0
        %588 = vmatpush1.msra.mxu0 0.0
        %589 = vmatprep.subr.mxu0 0.0
        %590 = vmatpush1.msra.mxu0 0.0
        %591 = vmatprep.subr.mxu0 0.0
        %592 = vmatpush1.msra.mxu0 0.0
        %593 = vmatprep.subr.mxu0 0.0
        %594 = vmatpush1.msra.mxu0 0.0
        %595 = vmatprep.subr.mxu0 0.0
        %596 = vmatpush1.msra.mxu0 %v193
        %597 = vmatprep.subr.mxu0 0.0
        %598 = vmatpush1.msra.mxu0 %v192
        %599 = vmatprep.subr.mxu0 0.0
        %600 = vmatpush2.msra.mxu0 0.0
        %601 = vmatprep.subr.mxu0 0.0
        %602 = vmatpush2.msra.mxu0 0.0
        %603 = vmatprep.subr.mxu0 0.0
        %604 = vmatpush2.msra.mxu0 0.0
        %605 = vmatprep.subr.mxu0 0.0
        %606 = vmatpush2.msra.mxu0 0.0
        %607 = vmatprep.subr.mxu0 0.0
        %608 = vmatpush2.msra.mxu0 0.0
        %609 = vmatprep.subr.mxu0 0.0
        %610 = vmatpush2.msra.mxu0 0.0
        %611 = vmatprep.subr.mxu0 0.0
        %612 = vmatpush2.msra.mxu0 0.0
        %613 = vmatprep.subr.mxu0 0.0
        %614 = vmatpush2.msra.mxu0 0.0
        %615 = vmatprep.subr.mxu0 0.0
        %616 = vmatpush2.msra.mxu0 0.0
        %617 = vmatprep.subr.mxu0 0.0
        %618 = vmatpush2.msra.mxu0 0.0
        %619 = vmatprep.subr.mxu0 0.0
        %620 = vmatpush2.msra.mxu0 0.0
        %621 = vmatprep.subr.mxu0 0.0
        %622 = vmatpush2.msra.mxu0 0.0
        %623 = vmatprep.subr.mxu0 0.0
        %624 = vmatpush2.msra.mxu0 0.0
        %625 = vmatprep.subr.mxu0 0.0
        %626 = vmatpush2.msra.mxu0 0.0
        %627 = vmatprep.subr.mxu0 0.0
        %628 = vmatpush2.msra.mxu0 0.0
        %629 = vmatprep.subr.mxu0 0.0
        %630 = vmatpush2.msra.mxu0 0.0
        %631 = vmatprep.mubr.f32.mxu0 0.0
        %632 = vmatmul.mubr.f32.gmra.mxu0 %v562
        %v633 = vpop.f32.mrf.mxu0
        %v634 = vadd.f32 0.0, %v633
        %v635 = vpop.f32.mrf.mxu0
        %636 = vmatprep.mubr.f32.mxu0 0.0
        %637 = vmatmul.mubr.f32.gmra.mxu0 %v565
        %v638 = vpop.f32.mrf.mxu0
        %v639 = vadd.f32 0.0, %v638
        %v640 = vpop.f32.mrf.mxu0
        %641 = vdwg.mxu0
        %642 = vmatprep.subr.mxu0 0.0
        %643 = vmatpush1.msra.mxu0 0.0
        %644 = vmatprep.subr.mxu0 0.0
        %645 = vmatpush1.msra.mxu0 0.0
        %646 = vmatprep.subr.mxu0 0.0
        %647 = vmatpush1.msra.mxu0 0.0
        %648 = vmatprep.subr.mxu0 0.0
        %649 = vmatpush1.msra.mxu0 0.0
        %650 = vmatprep.subr.mxu0 0.0
        %651 = vmatpush1.msra.mxu0 0.0
        %652 = vmatprep.subr.mxu0 0.0
        %653 = vmatpush1.msra.mxu0 0.0
        %654 = vmatprep.subr.mxu0 0.0
        %655 = vmatpush1.msra.mxu0 0.0
        %656 = vmatprep.subr.mxu0 0.0
        %657 = vmatpush1.msra.mxu0 0.0
        %658 = vmatprep.subr.mxu0 0.0
        %659 = vmatpush1.msra.mxu0 0.0
        %660 = vmatprep.subr.mxu0 0.0
        %661 = vmatpush1.msra.mxu0 0.0
        %662 = vmatprep.subr.mxu0 0.0
        %663 = vmatpush1.msra.mxu0 0.0
        %664 = vmatprep.subr.mxu0 0.0
        %665 = vmatpush1.msra.mxu0 0.0
        %666 = vmatprep.subr.mxu0 0.0
        %667 = vmatpush1.msra.mxu0 0.0
        %668 = vmatprep.subr.mxu0 0.0
        %669 = vmatpush1.msra.mxu0 0.0
        %670 = vmatprep.subr.mxu0 0.0
        %671 = vmatpush1.msra.mxu0 %v639
        %672 = vmatprep.subr.mxu0 0.0
        %673 = vmatpush1.msra.mxu0 %v634
        %674 = vmatprep.subr.mxu0 0.0
        %675 = vmatpush2.msra.mxu0 0.0
        %676 = vmatprep.subr.mxu0 0.0
        %677 = vmatpush2.msra.mxu0 0.0
        %678 = vmatprep.subr.mxu0 0.0
        %679 = vmatpush2.msra.mxu0 0.0
        %680 = vmatprep.subr.mxu0 0.0
        %681 = vmatpush2.msra.mxu0 0.0
        %682 = vmatprep.subr.mxu0 0.0
        %683 = vmatpush2.msra.mxu0 0.0
        %684 = vmatprep.subr.mxu0 0.0
        %685 = vmatpush2.msra.mxu0 0.0
        %686 = vmatprep.subr.mxu0 0.0
        %687 = vmatpush2.msra.mxu0 0.0
        %688 = vmatprep.subr.mxu0 0.0
        %689 = vmatpush2.msra.mxu0 0.0
        %690 = vmatprep.subr.mxu0 0.0
        %691 = vmatpush2.msra.mxu0 0.0
        %692 = vmatprep.subr.mxu0 0.0
        %693 = vmatpush2.msra.mxu0 0.0
        %694 = vmatprep.subr.mxu0 0.0
        %695 = vmatpush2.msra.mxu0 0.0
        %696 = vmatprep.subr.mxu0 0.0
        %697 = vmatpush2.msra.mxu0 0.0
        %698 = vmatprep.subr.mxu0 0.0
        %699 = vmatpush2.msra.mxu0 0.0
        %700 = vmatprep.subr.mxu0 0.0
        %701 = vmatpush2.msra.mxu0 0.0
        %702 = vmatprep.subr.mxu0 0.0
        %703 = vmatpush2.msra.mxu0 0.0
        %704 = vmatprep.subr.mxu0 0.0
        %705 = vmatpush2.msra.mxu0 0.0
        %706 = vmatprep.mubr.f32.mxu0 0.0
        %707 = vmatmul.mubr.f32.gmra.mxu0 %v283
        %v708 = vpop.f32.mrf.mxu0
        %v709 = vadd.f32 0.0, %v708
        %v710 = vpop.f32.mrf.mxu0
        %711 = vmatprep.mubr.f32.mxu0 0.0
        %712 = vmatmul.mubr.f32.gmra.mxu0 %v286
        %v713 = vpop.f32.mrf.mxu0
        %v714 = vadd.f32 0.0, %v713
        %v715 = vpop.f32.mrf.mxu0
        %716 = vmatprep.mubr.f32.mxu0 0.0
        %717 = vmatmul.mubr.f32.gmra.mxu0 %v289
        %v718 = vpop.f32.mrf.mxu0
        %v719 = vadd.f32 0.0, %v718
        %v720 = vpop.f32.mrf.mxu0
        %721 = vmatprep.mubr.f32.mxu0 0.0
        %722 = vmatmul.mubr.f32.gmra.mxu0 %v292
        %v723 = vpop.f32.mrf.mxu0
        %v724 = vadd.f32 0.0, %v723
        %v725 = vpop.f32.mrf.mxu0
        %726 = vdwg.mxu0
        %s727 = scalar_lea.vmem %s189, 64 [#allocation5]
        %728 = vst.msk [vmem:[%s727] sm:$0xff] %vm379, %v709
        %729 = vst.msk [vmem:[%s727 + $0x8] sm:$0xff] %vm379, %v714
        %730 = vst.msk [vmem:[%s727 + $0x10] sm:$0xff] %vm379, %v719
        %731 = vst.msk [vmem:[%s727 + $0x18] sm:$0xff] %vm379, %v724
        %s732 = scalar_lea.vmem %s167, 48 [#allocation2]
        %v733 = vld [vmem:[%s732] sm:$0xff]
        %v734 = vld [vmem:[%s732 + $0x8] sm:$0xff]
        %v736 = vsel %vm200, %v733, 0
        %v739 = vsel %vm200, %v734, 0
        %741 = vmatprep.subr.mxu0 0.0
        %742 = vmatpush1.msra.mxu0 0.0
        %743 = vmatprep.subr.mxu0 0.0
        %744 = vmatpush1.msra.mxu0 0.0
        %745 = vmatprep.subr.mxu0 0.0
        %746 = vmatpush1.msra.mxu0 0.0
        %747 = vmatprep.subr.mxu0 0.0
        %748 = vmatpush1.msra.mxu0 0.0
        %749 = vmatprep.subr.mxu0 0.0
        %750 = vmatpush1.msra.mxu0 0.0
        %751 = vmatprep.subr.mxu0 0.0
        %752 = vmatpush1.msra.mxu0 0.0
        %753 = vmatprep.subr.mxu0 0.0
        %754 = vmatpush1.msra.mxu0 0.0
        %755 = vmatprep.subr.mxu0 0.0
        %756 = vmatpush1.msra.mxu0 0.0
        %757 = vmatprep.subr.mxu0 0.0
        %758 = vmatpush1.msra.mxu0 0.0
        %759 = vmatprep.subr.mxu0 0.0
        %760 = vmatpush1.msra.mxu0 0.0
        %761 = vmatprep.subr.mxu0 0.0
        %762 = vmatpush1.msra.mxu0 0.0
        %763 = vmatprep.subr.mxu0 0.0
        %764 = vmatpush1.msra.mxu0 0.0
        %765 = vmatprep.subr.mxu0 0.0
        %766 = vmatpush1.msra.mxu0 0.0
        %767 = vmatprep.subr.mxu0 0.0
        %768 = vmatpush1.msra.mxu0 0.0
        %769 = vmatprep.subr.mxu0 0.0
        %770 = vmatpush1.msra.mxu0 %v193
        %771 = vmatprep.subr.mxu0 0.0
        %772 = vmatpush1.msra.mxu0 %v192
        %773 = vmatprep.subr.mxu0 0.0
        %774 = vmatpush2.msra.mxu0 0.0
        %775 = vmatprep.subr.mxu0 0.0
        %776 = vmatpush2.msra.mxu0 0.0
        %777 = vmatprep.subr.mxu0 0.0
        %778 = vmatpush2.msra.mxu0 0.0
        %779 = vmatprep.subr.mxu0 0.0
        %780 = vmatpush2.msra.mxu0 0.0
        %781 = vmatprep.subr.mxu0 0.0
        %782 = vmatpush2.msra.mxu0 0.0
        %783 = vmatprep.subr.mxu0 0.0
        %784 = vmatpush2.msra.mxu0 0.0
        %785 = vmatprep.subr.mxu0 0.0
        %786 = vmatpush2.msra.mxu0 0.0
        %787 = vmatprep.subr.mxu0 0.0
        %788 = vmatpush2.msra.mxu0 0.0
        %789 = vmatprep.subr.mxu0 0.0
        %790 = vmatpush2.msra.mxu0 0.0
        %791 = vmatprep.subr.mxu0 0.0
        %792 = vmatpush2.msra.mxu0 0.0
        %793 = vmatprep.subr.mxu0 0.0
        %794 = vmatpush2.msra.mxu0 0.0
        %795 = vmatprep.subr.mxu0 0.0
        %796 = vmatpush2.msra.mxu0 0.0
        %797 = vmatprep.subr.mxu0 0.0
        %798 = vmatpush2.msra.mxu0 0.0
        %799 = vmatprep.subr.mxu0 0.0
        %800 = vmatpush2.msra.mxu0 0.0
        %801 = vmatprep.subr.mxu0 0.0
        %802 = vmatpush2.msra.mxu0 0.0
        %803 = vmatprep.subr.mxu0 0.0
        %804 = vmatpush2.msra.mxu0 0.0
        %805 = vmatprep.mubr.f32.mxu0 0.0
        %806 = vmatmul.mubr.f32.gmra.mxu0 %v736
        %v807 = vpop.f32.mrf.mxu0
        %v808 = vadd.f32 0.0, %v807
        %v809 = vpop.f32.mrf.mxu0
        %810 = vmatprep.mubr.f32.mxu0 0.0
        %811 = vmatmul.mubr.f32.gmra.mxu0 %v739
        %v812 = vpop.f32.mrf.mxu0
        %v813 = vadd.f32 0.0, %v812
        %v814 = vpop.f32.mrf.mxu0
        %815 = vdwg.mxu0
        %816 = vmatprep.subr.mxu0 0.0
        %817 = vmatpush1.msra.mxu0 0.0
        %818 = vmatprep.subr.mxu0 0.0
        %819 = vmatpush1.msra.mxu0 0.0
        %820 = vmatprep.subr.mxu0 0.0
        %821 = vmatpush1.msra.mxu0 0.0
        %822 = vmatprep.subr.mxu0 0.0
        %823 = vmatpush1.msra.mxu0 0.0
        %824 = vmatprep.subr.mxu0 0.0
        %825 = vmatpush1.msra.mxu0 0.0
        %826 = vmatprep.subr.mxu0 0.0
        %827 = vmatpush1.msra.mxu0 0.0
        %828 = vmatprep.subr.mxu0 0.0
        %829 = vmatpush1.msra.mxu0 0.0
        %830 = vmatprep.subr.mxu0 0.0
        %831 = vmatpush1.msra.mxu0 0.0
        %832 = vmatprep.subr.mxu0 0.0
        %833 = vmatpush1.msra.mxu0 0.0
        %834 = vmatprep.subr.mxu0 0.0
        %835 = vmatpush1.msra.mxu0 0.0
        %836 = vmatprep.subr.mxu0 0.0
        %837 = vmatpush1.msra.mxu0 0.0
        %838 = vmatprep.subr.mxu0 0.0
        %839 = vmatpush1.msra.mxu0 0.0
        %840 = vmatprep.subr.mxu0 0.0
        %841 = vmatpush1.msra.mxu0 0.0
        %842 = vmatprep.subr.mxu0 0.0
        %843 = vmatpush1.msra.mxu0 0.0
        %844 = vmatprep.subr.mxu0 0.0
        %845 = vmatpush1.msra.mxu0 %v813
        %846 = vmatprep.subr.mxu0 0.0
        %847 = vmatpush1.msra.mxu0 %v808
        %848 = vmatprep.subr.mxu0 0.0
        %849 = vmatpush2.msra.mxu0 0.0
        %850 = vmatprep.subr.mxu0 0.0
        %851 = vmatpush2.msra.mxu0 0.0
        %852 = vmatprep.subr.mxu0 0.0
        %853 = vmatpush2.msra.mxu0 0.0
        %854 = vmatprep.subr.mxu0 0.0
        %855 = vmatpush2.msra.mxu0 0.0
        %856 = vmatprep.subr.mxu0 0.0
        %857 = vmatpush2.msra.mxu0 0.0
        %858 = vmatprep.subr.mxu0 0.0
        %859 = vmatpush2.msra.mxu0 0.0
        %860 = vmatprep.subr.mxu0 0.0
        %861 = vmatpush2.msra.mxu0 0.0
        %862 = vmatprep.subr.mxu0 0.0
        %863 = vmatpush2.msra.mxu0 0.0
        %864 = vmatprep.subr.mxu0 0.0
        %865 = vmatpush2.msra.mxu0 0.0
        %866 = vmatprep.subr.mxu0 0.0
        %867 = vmatpush2.msra.mxu0 0.0
        %868 = vmatprep.subr.mxu0 0.0
        %869 = vmatpush2.msra.mxu0 0.0
        %870 = vmatprep.subr.mxu0 0.0
        %871 = vmatpush2.msra.mxu0 0.0
        %872 = vmatprep.subr.mxu0 0.0
        %873 = vmatpush2.msra.mxu0 0.0
        %874 = vmatprep.subr.mxu0 0.0
        %875 = vmatpush2.msra.mxu0 0.0
        %876 = vmatprep.subr.mxu0 0.0
        %877 = vmatpush2.msra.mxu0 0.0
        %878 = vmatprep.subr.mxu0 0.0
        %879 = vmatpush2.msra.mxu0 0.0
        %880 = vmatprep.mubr.f32.mxu0 0.0
        %881 = vmatmul.mubr.f32.gmra.mxu0 %v283
        %v882 = vpop.f32.mrf.mxu0
        %v883 = vadd.f32 0.0, %v882
        %v884 = vpop.f32.mrf.mxu0
        %885 = vmatprep.mubr.f32.mxu0 0.0
        %886 = vmatmul.mubr.f32.gmra.mxu0 %v286
        %v887 = vpop.f32.mrf.mxu0
        %v888 = vadd.f32 0.0, %v887
        %v889 = vpop.f32.mrf.mxu0
        %890 = vmatprep.mubr.f32.mxu0 0.0
        %891 = vmatmul.mubr.f32.gmra.mxu0 %v289
        %v892 = vpop.f32.mrf.mxu0
        %v893 = vadd.f32 0.0, %v892
        %v894 = vpop.f32.mrf.mxu0
        %895 = vmatprep.mubr.f32.mxu0 0.0
        %896 = vmatmul.mubr.f32.gmra.mxu0 %v292
        %v897 = vpop.f32.mrf.mxu0
        %v898 = vadd.f32 0.0, %v897
        %v899 = vpop.f32.mrf.mxu0
        %900 = vdwg.mxu0
        %s901 = scalar_lea.vmem %s189, 96 [#allocation5]
        %902 = vst.msk [vmem:[%s901] sm:$0xff] %vm379, %v883
        %903 = vst.msk [vmem:[%s901 + $0x8] sm:$0xff] %vm379, %v888
        %904 = vst.msk [vmem:[%s901 + $0x10] sm:$0xff] %vm379, %v893
        %905 = vst.msk [vmem:[%s901 + $0x18] sm:$0xff] %vm379, %v898
        %s906 = sand.u32 %s96, 1
        %s907 = scalar_lea.sflag [#allocation4], %s906
        %s908 = sand.u32 %s96, 1
        %s909 = smul.addr %s908, 128
        %s910 = scalar_lea.vmem [#allocation5], %s909
        // Predicated region
        $region37: #{tpu_custom_call.1} parent=31 // pred_check
          %p911 = pneg %p106
        $region38: #{tpu_custom_call.1} parent=31 // pred_check_branch
          %913 = sbr.rel (%p911) target = $region40
        $region39: #{tpu_custom_call.1} parent=31 // pred_region
          %s914 = smul.u32 4, %s20
          %s916 = ssub.s32 2048, 2048
          %917 = vsyncadd %s907, %s916
          %s918 = smul.addr %s914, 4
          %s919 = smul.addr %s918, 128
          %s920 = scalar_lea.hbm %s3, %s919
          %s921 = sshll.u32 %s910, 4
          %s922 = int_to_ptr.vmem [resolvable:$true] %s921
          %927 = dma.vmem_to_hbm [thread:$0]  %s922, 2048, %s920, %s907, 128, 128, 8
        $region40: #{tpu_custom_call.1} parent=31 // pred_fallthru
          _
      $region32: #{tpu_custom_call.1} parent=5 // pred_fallthru
        _
      %p928 = scmp.le.s32.totalorder 2, %s15
      // Predicated region
      $region41: #{tpu_custom_call.1} parent=5 // pred_check
        %p929 = pneg %p928
      $region42: #{tpu_custom_call.1} parent=5 // pred_check_branch
        %931 = sbr.rel (%p929) target = $region44
      $region43: #{tpu_custom_call.1} parent=5 // pred_region
        %s932 = ssub.s32 %s15, 2
        // Predicated region
        $region45: #{tpu_custom_call.1} parent=43 // pred_check
          %p933 = pneg %p112
        $region46: #{tpu_custom_call.1} parent=43 // pred_check_branch
          %935 = sbr.rel (%p933) target = $region48
        $region47: #{tpu_custom_call.1} parent=43 // pred_region
          %s936 = sand.u32 %s97, 1
          %s937 = scalar_lea.sflag [#allocation4], %s936
          %s938 = sand.u32 %s97, 1
          %s939 = smul.addr %s938, 128
          %s940 = scalar_lea.vmem [#allocation5], %s939
          %941 = dma.done %s937, 2048
        $region48: #{tpu_custom_call.1} parent=43 // pred_fallthru
          _
      $region44: #{tpu_custom_call.1} parent=5 // pred_fallthru
        _
    $region6: #{tpu_custom_call.1} parent=1 // loop_footer
      %s19 = sadd.s32 1, %s15
    $region7: #{tpu_custom_call.1} parent=1 // loop_footer_branch
      %14 = sbr.rel target = $region3
    $region8: #{tpu_custom_call.1} parent=1 // loop_exit
      _
    %942 = vsyncpa [#allocation3], 1
    %s943 = scalar_lea.sflag [#allocation3], 1
    %944 = vsyncpa %s943, 1
    %945 = vsyncpa [#allocation4], 1
    %s946 = scalar_lea.sflag [#allocation4], 1
    %947 = vsyncpa %s946, 1

</llo_original>
